<compile_context>
chip_gen: v7x
topology: tpu7x:2x2x1
jax: 0.10.0
libtpu: 0.0.40
codegen_flags: <defaults>
</compile_context>

<pallas_src>
import jax
import jax.numpy as jnp
from jax.experimental import pallas as pl
from jax.experimental.pallas import tpu as pltpu


# ----------------------------------------------------------------------------- kernel
def roller_pool_kernel(ts_ref, hidden_ref, pm_ref, red_ref, out_ref):
    """One lane-tile of RollerPooling (edges on the lane axis).

    ts_ref     : [1, ET]   int32  target_size (lane-dense row)
    hidden_ref : [C, ET]   f32    hidden, transposed so edges are lanes
    pm_ref     : [C*C, C]  f32    pm_rows[t*C + i, j] = P[t, i, j]
    red_ref    : [C, C*C]  f32    red[i, t*C + j]     = (j == i)
    out_ref    : [C, ET]   f32    out[i, e] = sum_j P[t_e, i, j] * hidden[j, e]
    """
    h = hidden_ref[...]                                   # [C, ET]
    C = h.shape[0]

    # torch indexing: pool_matrix[target_size - 1]; -1 wraps to the last matrix.
    idx = ts_ref[...] - 1                                 # [1, ET] int32
    idx = jnp.where(idx < 0, idx + C, idx)

    # All candidate poolings at once (single MXU matmul over every t):
    #   allp[t*C + i, e] = sum_j P[t, i, j] * h[j, e]
    allp = jnp.dot(pm_ref[...], h,
                   preferred_element_type=jnp.float32)    # [C*C, ET]

    # Keep only the rows of the selected block t == idx_e (range compare, no int divide).
    rows = jax.lax.broadcasted_iota(jnp.int32, allp.shape, 0)   # [C*C, ET]
    lo = idx * C                                                # [1, ET]
    masked = jnp.where((rows >= lo) & (rows < lo + C), allp, 0.0)

    # out[i, e] = sum_t masked[t*C + i, e]  via a 0/1 reduction matmul.
    out_ref[...] = jnp.dot(red_ref[...], masked,
                           preferred_element_type=jnp.float32)  # [C, ET]


# ----------------------------------------------------------------------------- wrapper
def make_pool_matrix(n_channel):
    ones = jnp.ones((n_channel, n_channel), jnp.float32)
    mats = []
    for i in range(n_channel):
        w = n_channel - i
        mats.append((jnp.triu(ones) - jnp.triu(ones, k=w)) / w)
    return jnp.stack(mats)                                      # [C, C, C]


def _round_up(x, m):
    return ((x + m - 1) // m) * m


_LANE = 128
_MAX_LANE_BLOCKS = 8   # ET <= 1024: big enough to amortize step overhead, safe on v5e VMEM


@jax.jit
def roller_pooling(pool_matrix, hidden, target_size):
    """hidden: [E, C] f32, target_size: [E] int -> [E, C, 1] f32 (matches torch.bmm)."""
    E, C = hidden.shape

    # ---- host-side constants (tiny, DMA'd once per block) -----------------------
    pm_rows = pool_matrix.astype(jnp.float32).reshape(C * C, C)   # [C*C, C]
    red_mat = jnp.tile(jnp.eye(C, dtype=jnp.float32), (1, C))     # [C, C*C]

    # ---- edge tiling: E is the lane axis -----------------------------------------
    # Large lane tiles cut per-step overhead; keep >=2 grid steps when there is enough
    # work so v7x's two TensorCores can both run the "parallel" axis.
    n_blocks = pl.cdiv(E, _LANE)
    blocks_per_tile = min(_MAX_LANE_BLOCKS, max(1, n_blocks // 2)) if n_blocks >= 2 else 1
    ET = blocks_per_tile * _LANE
    E_pad = _round_up(E, ET)

    hidden_t = jnp.zeros((C, E_pad), jnp.float32).at[:, :E].set(
        hidden.astype(jnp.float32).T)                             # [C, E_pad]
    ts_row = jnp.ones((1, E_pad), jnp.int32).at[:, :E].set(
        target_size.astype(jnp.int32).reshape(1, E))              # pad -> valid idx 0

    grid = (E_pad // ET,)

    out_t = pl.pallas_call(
        roller_pool_kernel,
        out_shape=jax.ShapeDtypeStruct((C, E_pad), jnp.float32),
        grid=grid,
        in_specs=[
            pl.BlockSpec((1, ET), lambda i: (0, i)),              # target_size row
            pl.BlockSpec((C, ET), lambda i: (0, i)),              # hidden (transposed)
            pl.BlockSpec((C * C, C), lambda i: (0, 0)),           # pool matrix rows (const)
            pl.BlockSpec((C, C * C), lambda i: (0, 0)),           # reduction matrix (const)
        ],
        out_specs=pl.BlockSpec((C, ET), lambda i: (0, i)),
        compiler_params=pltpu.CompilerParams(
            dimension_semantics=("parallel",)),
    )(ts_row, hidden_t, pm_rows, red_mat)

    return out_t[:, :E].T.reshape(E, C, 1)                        # match torch bmm output


# ----------------------------------------------------------------------------- main
if __name__ == "__main__":
    key = jax.random.PRNGKey(0)
    E = 100          # n_edges (deliberately not lane-aligned to exercise padding)
    C = 14           # n_channel (diffab atom channels)

    k0, k1 = jax.random.split(key)
    hidden = jax.random.normal(k0, (E, C), jnp.float32)
    target_size = jax.random.randint(k1, (E,), 1, C + 1)          # in [1, C]

    pool_matrix = make_pool_matrix(C)

    out = roller_pooling(pool_matrix, hidden, target_size)
    out = jax.block_until_ready(out)

    # reference (plain JAX, mirrors the PyTorch forward)
    ref = jnp.einsum("eij,ej->ei",
                     pool_matrix[target_size.astype(jnp.int32) - 1],
                     hidden).reshape(E, C, 1)

    assert out.shape == (E, C, 1)
    assert bool(jnp.all(jnp.isfinite(out)))
    assert bool(jnp.allclose(out, ref, atol=1e-5, rtol=1e-5)), "mismatch vs reference"
    print("KERNEL_OK")
</pallas_src>

<mosaic_0001>
module attributes {stable_mosaic.version = 11 : i64} {
  func.func @roller_pool_kernel(%arg0: i32, %arg1: memref<1x128xi32, #tpu.memory_space<vmem>>, %arg2: memref<14x128xf32, #tpu.memory_space<vmem>>, %arg3: memref<196x14xf32, #tpu.memory_space<vmem>>, %arg4: memref<14x196xf32, #tpu.memory_space<vmem>>, %arg5: memref<14x128xf32, #tpu.memory_space<vmem>>) attributes {dimension_semantics = [#tpu.dimension_semantics<parallel>], iteration_bounds = array<i64: 1>, scalar_prefetch = 0 : i64, scratch_operands = 0 : i64, tpu.core_type = #tpu.core_type<tc>, window_params = [{transform_indices = @transform_0, window_bounds = array<i64: 1, 128>}, {transform_indices = @transform_1, window_bounds = array<i64: 14, 128>}, {pipeline_mode = #tpu.pipeline_mode<synchronous>, transform_indices = @transform_2, window_bounds = array<i64: 196, 14>}, {pipeline_mode = #tpu.pipeline_mode<synchronous>, transform_indices = @transform_3, window_bounds = array<i64: 14, 196>}, {transform_indices = @transform_4, window_bounds = array<i64: 14, 128>}]} {
    %c0 = arith.constant 0 : index
    %c0_0 = arith.constant 0 : index
    %0 = vector.load %arg2[%c0, %c0_0] : memref<14x128xf32, #tpu.memory_space<vmem>>, vector<14x128xf32>
    %c0_1 = arith.constant 0 : index
    %c0_2 = arith.constant 0 : index
    %1 = vector.load %arg1[%c0_1, %c0_2] : memref<1x128xi32, #tpu.memory_space<vmem>>, vector<1x128xi32>
    %c1_i32 = arith.constant 1 : i32
    %2 = vector.broadcast %c1_i32 : i32 to vector<1x128xi32>
    %3 = arith.subi %1, %2 : vector<1x128xi32>
    %c0_i32 = arith.constant 0 : i32
    %4 = vector.broadcast %c0_i32 : i32 to vector<1x128xi32>
    %5 = arith.cmpi slt, %3, %4 : vector<1x128xi32>
    %c14_i32 = arith.constant 14 : i32
    %6 = vector.broadcast %c14_i32 : i32 to vector<1x128xi32>
    %7 = arith.addi %3, %6 : vector<1x128xi32>
    %8 = arith.select %5, %7, %3 : vector<1x128xi1>, vector<1x128xi32>
    %c0_3 = arith.constant 0 : index
    %c0_4 = arith.constant 0 : index
    %9 = vector.load %arg3[%c0_3, %c0_4] : memref<196x14xf32, #tpu.memory_space<vmem>>, vector<196x14xf32>
    %cst = arith.constant dense<0.000000e+00> : vector<196x128xf32>
    %10 = tpu.matmul %9, %0, %cst {dimension_numbers = #tpu.dot_dimension_numbers<[1], [0], [0], [1], [0, 0, 1, 1], [], []>} : vector<196x14xf32>, vector<14x128xf32>, vector<196x128xf32> -> vector<196x128xf32>
    %11 = tpu.iota {dimensions = array<i32: 0>} : vector<196x128xi32>
    %c14_i32_5 = arith.constant 14 : i32
    %12 = vector.broadcast %c14_i32_5 : i32 to vector<1x128xi32>
    %13 = arith.muli %8, %12 : vector<1x128xi32>
    %14 = vector.broadcast %13 : vector<1x128xi32> to vector<196x128xi32>
    %15 = arith.cmpi sge, %11, %14 : vector<196x128xi32>
    %c14_i32_6 = arith.constant 14 : i32
    %16 = vector.broadcast %c14_i32_6 : i32 to vector<1x128xi32>
    %17 = arith.addi %13, %16 : vector<1x128xi32>
    %18 = vector.broadcast %17 : vector<1x128xi32> to vector<196x128xi32>
    %19 = arith.cmpi slt, %11, %18 : vector<196x128xi32>
    %20 = arith.andi %15, %19 : vector<196x128xi1>
    %cst_7 = arith.constant 0.000000e+00 : f32
    %21 = vector.broadcast %cst_7 : f32 to vector<196x128xf32>
    %22 = arith.select %20, %10, %21 : vector<196x128xi1>, vector<196x128xf32>
    %c0_8 = arith.constant 0 : index
    %c0_9 = arith.constant 0 : index
    %23 = vector.load %arg4[%c0_8, %c0_9] : memref<14x196xf32, #tpu.memory_space<vmem>>, vector<14x196xf32>
    %cst_10 = arith.constant dense<0.000000e+00> : vector<14x128xf32>
    %24 = tpu.matmul %23, %22, %cst_10 {dimension_numbers = #tpu.dot_dimension_numbers<[1], [0], [0], [1], [0, 0, 1, 1], [], []>} : vector<14x196xf32>, vector<196x128xf32>, vector<14x128xf32> -> vector<14x128xf32>
    %c0_11 = arith.constant 0 : index
    %c0_12 = arith.constant 0 : index
    %25 = vector.load %arg5[%c0_11, %c0_12] : memref<14x128xf32, #tpu.memory_space<vmem>>, vector<14x128xf32>
    tpu.vector_store %arg5[%c0_11, %c0_12], %24 {strides = array<i32>} : memref<14x128xf32, #tpu.memory_space<vmem>>, vector<14x128xf32>,
    return
  }
  func.func @transform_0(%arg0: i32) -> (i32, i32) {
    %c0_i32 = arith.constant 0 : i32
    %c0_i32_0 = arith.constant 0 : i32
    return %c0_i32, %arg0 : i32, i32
  }
  func.func @transform_1(%arg0: i32) -> (i32, i32) {
    %c0_i32 = arith.constant 0 : i32
    %c0_i32_0 = arith.constant 0 : i32
    return %c0_i32, %arg0 : i32, i32
  }
  func.func @transform_2(%arg0: i32) -> (i32, i32) {
    %c0_i32 = arith.constant 0 : i32
    %c0_i32_0 = arith.constant 0 : i32
    %c0_i32_1 = arith.constant 0 : i32
    return %c0_i32, %c0_i32_0 : i32, i32
  }
  func.func @transform_3(%arg0: i32) -> (i32, i32) {
    %c0_i32 = arith.constant 0 : i32
    %c0_i32_0 = arith.constant 0 : i32
    %c0_i32_1 = arith.constant 0 : i32
    return %c0_i32, %c0_i32_0 : i32, i32
  }
  func.func @transform_4(%arg0: i32) -> (i32, i32) {
    %c0_i32 = arith.constant 0 : i32
    %c0_i32_0 = arith.constant 0 : i32
    return %c0_i32, %arg0 : i32, i32
  }
}

</mosaic_0001>

<llo_original>
// kernel: tile.9
$region0: #{tile.9}
  %s0 = inlined_call_operand.vmem [shape: f32[14,14,14], index: 0, kind: input, shape index: {}]
  %s1 = inlined_call_operand.vmem [shape: f32[14,196], index: 1, kind: output, shape index: {}]
  %s2 = smov 3
  %v3 = vld [vmem:[%s0] ss:$16 sm:%s2]
  %s4 = smov 12
  %v5 = vld [vmem:[%s0] ss:$16 sm:%s4]
  %vm6 = vcmask 1043458
  %v7 = vsel %vm6, %v5, %v3
  %s8 = smov 48
  %v9 = vld [vmem:[%s0] ss:$16 sm:%s8]
  %vm10 = vcmask 1045508
  %v11 = vsel %vm10, %v9, %v7
  %s12 = smov 192
  %v13 = vld [vmem:[%s0] ss:$16 sm:%s12]
  %vm14 = vcmask 1047558
  %v15 = vsel %vm14, %v13, %v11
  %vm16 = vcmask 113664
  %17 = vst.msk [vmem:[%s1] sm:$0xff] %vm16, %v15
  %s18 = scalar_lea.vmem %s0, 128
  %s19 = smov 3
  %v20 = vld [vmem:[%s18] ss:$16 sm:%s19]
  %s21 = scalar_lea.vmem %s0, 128
  %s22 = smov 12
  %v23 = vld [vmem:[%s21] ss:$16 sm:%s22]
  %vm24 = vcmask 1043458
  %v25 = vsel %vm24, %v23, %v20
  %s26 = scalar_lea.vmem %s0, 128
  %s27 = smov 48
  %v28 = vld [vmem:[%s26] ss:$16 sm:%s27]
  %vm29 = vcmask 1045508
  %v30 = vsel %vm29, %v28, %v25
  %vm31 = vcmask 113664
  %s32 = scalar_lea.vmem %s1, 16
  %33 = vst.msk [vmem:[%s32] sm:$0x3f] %vm31, %v30
  %s34 = scalar_lea.vmem %s0, 9
  %s35 = smov 3
  %v36 = vld [vmem:[%s34] ss:$16 sm:%s35]
  %s37 = scalar_lea.vmem %s0, 9
  %s38 = smov 12
  %v39 = vld [vmem:[%s37] ss:$16 sm:%s38]
  %vm40 = vcmask 1043458
  %v41 = vsel %vm40, %v39, %v36
  %s42 = scalar_lea.vmem %s0, 9
  %s43 = smov 48
  %v44 = vld [vmem:[%s42] ss:$16 sm:%s43]
  %vm45 = vcmask 1045508
  %v46 = vsel %vm45, %v44, %v41
  %s47 = scalar_lea.vmem %s0, 9
  %s48 = smov 192
  %v49 = vld [vmem:[%s47] ss:$16 sm:%s48]
  %vm50 = vcmask 1047558
  %v51 = vsel %vm50, %v49, %v46
  %s52 = scalar_lea.vmem %s0, 9
  %s53 = smov 3
  %v54 = vld [vmem:[%s52] ss:$16 sm:%s53]
  %s55 = scalar_lea.vmem %s0, 9
  %s56 = smov 12
  %v57 = vld [vmem:[%s55] ss:$16 sm:%s56]
  %vm58 = vcmask 1043458
  %v59 = vsel %vm58, %v57, %v54
  %s60 = scalar_lea.vmem %s0, 9
  %s61 = smov 48
  %v62 = vld [vmem:[%s60] ss:$16 sm:%s61]
  %vm63 = vcmask 1045508
  %v64 = vsel %vm63, %v62, %v59
  %s65 = scalar_lea.vmem %s0, 9
  %s66 = smov 192
  %v67 = vld [vmem:[%s65] ss:$16 sm:%s66]
  %vm68 = vcmask 1047558
  %v69 = vsel %vm68, %v67, %v64
  %vm70 = vcmask 15360
  %v71 = vsel %vm70, %v69, %v51
  %72 = vrot.lane.b32.xlu0 %v71, 126
  %v73 = vpop.permute.xlu0 %72
  %vm74 = vcmask 97280
  %s75 = scalar_lea.vmem %s1, 8
  %76 = vst.msk [vmem:[%s75] sm:$0xff] %vm74, %v73
  %vm77 = vcmask 1048560
  %78 = vst.msk [vmem:[%s1] sm:$0xff] %vm77, %v73
  %s79 = scalar_lea.vmem %s0, 137
  %s80 = smov 3
  %v81 = vld [vmem:[%s79] ss:$16 sm:%s80]
  %s82 = scalar_lea.vmem %s0, 137
  %s83 = smov 12
  %v84 = vld [vmem:[%s82] ss:$16 sm:%s83]
  %vm85 = vcmask 1043458
  %v86 = vsel %vm85, %v84, %v81
  %s87 = scalar_lea.vmem %s0, 137
  %s88 = smov 48
  %v89 = vld [vmem:[%s87] ss:$16 sm:%s88]
  %vm90 = vcmask 1045508
  %v91 = vsel %vm90, %v89, %v86
  %s92 = scalar_lea.vmem %s0, 137
  %s93 = smov 3
  %v94 = vld [vmem:[%s92] ss:$16 sm:%s93]
  %s95 = scalar_lea.vmem %s0, 137
  %s96 = smov 12
  %v97 = vld [vmem:[%s95] ss:$16 sm:%s96]
  %vm98 = vcmask 1043458
  %v99 = vsel %vm98, %v97, %v94
  %s100 = scalar_lea.vmem %s0, 137
  %s101 = smov 48
  %v102 = vld [vmem:[%s100] ss:$16 sm:%s101]
  %vm103 = vcmask 1045508
  %v104 = vsel %vm103, %v102, %v99
  %vm105 = vcmask 15360
  %v106 = vsel %vm105, %v104, %v91
  %107 = vrot.lane.b32.xlu0 %v106, 126
  %v108 = vpop.permute.xlu0 %107
  %vm109 = vcmask 97280
  %s110 = scalar_lea.vmem %s1, 24
  %111 = vst.msk [vmem:[%s110] sm:$0x3f] %vm109, %v108
  %vm112 = vcmask 1048560
  %s113 = scalar_lea.vmem %s1, 16
  %114 = vst.msk [vmem:[%s113] sm:$0x3f] %vm112, %v108
  %s115 = scalar_lea.vmem %s0, 8
  %s116 = smov 3
  %v117 = vld [vmem:[%s115] ss:$16 sm:%s116]
  %s118 = scalar_lea.vmem %s0, 8
  %s119 = smov 12
  %v120 = vld [vmem:[%s118] ss:$16 sm:%s119]
  %vm121 = vcmask 1043458
  %v122 = vsel %vm121, %v120, %v117
  %s123 = scalar_lea.vmem %s0, 8
  %s124 = smov 48
  %v125 = vld [vmem:[%s123] ss:$16 sm:%s124]
  %vm126 = vcmask 1045508
  %v127 = vsel %vm126, %v125, %v122
  %s128 = scalar_lea.vmem %s0, 8
  %s129 = smov 192
  %v130 = vld [vmem:[%s128] ss:$16 sm:%s129]
  %vm131 = vcmask 1047558
  %v132 = vsel %vm131, %v130, %v127
  %133 = vrot.lane.b32.xlu0 %v132, 112
  %v134 = vpop.permute.xlu0 %133
  %vm135 = vcmask 1032064
  %136 = vst.msk [vmem:[%s1] sm:$0xff] %vm135, %v134
  %s137 = scalar_lea.vmem %s0, 136
  %s138 = smov 3
  %v139 = vld [vmem:[%s137] ss:$16 sm:%s138]
  %s140 = scalar_lea.vmem %s0, 136
  %s141 = smov 12
  %v142 = vld [vmem:[%s140] ss:$16 sm:%s141]
  %vm143 = vcmask 1043458
  %v144 = vsel %vm143, %v142, %v139
  %s145 = scalar_lea.vmem %s0, 136
  %s146 = smov 48
  %v147 = vld [vmem:[%s145] ss:$16 sm:%s146]
  %vm148 = vcmask 1045508
  %v149 = vsel %vm148, %v147, %v144
  %150 = vrot.lane.b32.xlu0 %v149, 112
  %v151 = vpop.permute.xlu0 %150
  %vm152 = vcmask 1032064
  %s153 = scalar_lea.vmem %s1, 16
  %154 = vst.msk [vmem:[%s153] sm:$0x3f] %vm152, %v151
  %s155 = scalar_lea.vmem %s0, 7
  %s156 = smov 3
  %v157 = vld [vmem:[%s155] ss:$16 sm:%s156]
  %s158 = scalar_lea.vmem %s0, 7
  %s159 = smov 12
  %v160 = vld [vmem:[%s158] ss:$16 sm:%s159]
  %vm161 = vcmask 1043458
  %v162 = vsel %vm161, %v160, %v157
  %s163 = scalar_lea.vmem %s0, 7
  %s164 = smov 48
  %v165 = vld [vmem:[%s163] ss:$16 sm:%s164]
  %vm166 = vcmask 1045508
  %v167 = vsel %vm166, %v165, %v162
  %s168 = scalar_lea.vmem %s0, 7
  %s169 = smov 192
  %v170 = vld [vmem:[%s168] ss:$16 sm:%s169]
  %vm171 = vcmask 1047558
  %v172 = vsel %vm171, %v170, %v167
  %173 = vrot.lane.b32.xlu0 %v172, 98
  %v174 = vpop.permute.xlu0 %173
  %vm175 = vcmask 917264
  %176 = vst.msk [vmem:[%s1] sm:$0xff] %vm175, %v174
  %s177 = scalar_lea.vmem %s0, 135
  %s178 = smov 3
  %v179 = vld [vmem:[%s177] ss:$16 sm:%s178]
  %s180 = scalar_lea.vmem %s0, 135
  %s181 = smov 12
  %v182 = vld [vmem:[%s180] ss:$16 sm:%s181]
  %vm183 = vcmask 1043458
  %v184 = vsel %vm183, %v182, %v179
  %s185 = scalar_lea.vmem %s0, 135
  %s186 = smov 48
  %v187 = vld [vmem:[%s185] ss:$16 sm:%s186]
  %vm188 = vcmask 1045508
  %v189 = vsel %vm188, %v187, %v184
  %190 = vrot.lane.b32.xlu0 %v189, 98
  %v191 = vpop.permute.xlu0 %190
  %vm192 = vcmask 917264
  %s193 = scalar_lea.vmem %s1, 16
  %194 = vst.msk [vmem:[%s193] sm:$0x3f] %vm192, %v191
  %s195 = scalar_lea.vmem %s0, 6
  %s196 = smov 3
  %v197 = vld [vmem:[%s195] ss:$16 sm:%s196]
  %s198 = scalar_lea.vmem %s0, 6
  %s199 = smov 12
  %v200 = vld [vmem:[%s198] ss:$16 sm:%s199]
  %vm201 = vcmask 1043458
  %v202 = vsel %vm201, %v200, %v197
  %s203 = scalar_lea.vmem %s0, 6
  %s204 = smov 48
  %v205 = vld [vmem:[%s203] ss:$16 sm:%s204]
  %vm206 = vcmask 1045508
  %v207 = vsel %vm206, %v205, %v202
  %s208 = scalar_lea.vmem %s0, 6
  %s209 = smov 192
  %v210 = vld [vmem:[%s208] ss:$16 sm:%s209]
  %vm211 = vcmask 1047558
  %v212 = vsel %vm211, %v210, %v207
  %213 = vrot.lane.b32.xlu0 %v212, 84
  %v214 = vpop.permute.xlu0 %213
  %vm215 = vcmask 802464
  %216 = vst.msk [vmem:[%s1] sm:$0xff] %vm215, %v214
  %s217 = scalar_lea.vmem %s0, 134
  %s218 = smov 3
  %v219 = vld [vmem:[%s217] ss:$16 sm:%s218]
  %s220 = scalar_lea.vmem %s0, 134
  %s221 = smov 12
  %v222 = vld [vmem:[%s220] ss:$16 sm:%s221]
  %vm223 = vcmask 1043458
  %v224 = vsel %vm223, %v222, %v219
  %s225 = scalar_lea.vmem %s0, 134
  %s226 = smov 48
  %v227 = vld [vmem:[%s225] ss:$16 sm:%s226]
  %vm228 = vcmask 1045508
  %v229 = vsel %vm228, %v227, %v224
  %230 = vrot.lane.b32.xlu0 %v229, 84
  %v231 = vpop.permute.xlu0 %230
  %vm232 = vcmask 802464
  %s233 = scalar_lea.vmem %s1, 16
  %234 = vst.msk [vmem:[%s233] sm:$0x3f] %vm232, %v231
  %s235 = scalar_lea.vmem %s0, 5
  %s236 = smov 3
  %v237 = vld [vmem:[%s235] ss:$16 sm:%s236]
  %s238 = scalar_lea.vmem %s0, 5
  %s239 = smov 12
  %v240 = vld [vmem:[%s238] ss:$16 sm:%s239]
  %vm241 = vcmask 1043458
  %v242 = vsel %vm241, %v240, %v237
  %s243 = scalar_lea.vmem %s0, 5
  %s244 = smov 48
  %v245 = vld [vmem:[%s243] ss:$16 sm:%s244]
  %vm246 = vcmask 1045508
  %v247 = vsel %vm246, %v245, %v242
  %s248 = scalar_lea.vmem %s0, 5
  %s249 = smov 192
  %v250 = vld [vmem:[%s248] ss:$16 sm:%s249]
  %vm251 = vcmask 1047558
  %v252 = vsel %vm251, %v250, %v247
  %253 = vrot.lane.b32.xlu0 %v252, 70
  %v254 = vpop.permute.xlu0 %253
  %vm255 = vcmask 687664
  %256 = vst.msk [vmem:[%s1] sm:$0xff] %vm255, %v254
  %s257 = scalar_lea.vmem %s0, 133
  %s258 = smov 3
  %v259 = vld [vmem:[%s257] ss:$16 sm:%s258]
  %s260 = scalar_lea.vmem %s0, 133
  %s261 = smov 12
  %v262 = vld [vmem:[%s260] ss:$16 sm:%s261]
  %vm263 = vcmask 1043458
  %v264 = vsel %vm263, %v262, %v259
  %s265 = scalar_lea.vmem %s0, 133
  %s266 = smov 48
  %v267 = vld [vmem:[%s265] ss:$16 sm:%s266]
  %vm268 = vcmask 1045508
  %v269 = vsel %vm268, %v267, %v264
  %270 = vrot.lane.b32.xlu0 %v269, 70
  %v271 = vpop.permute.xlu0 %270
  %vm272 = vcmask 687664
  %s273 = scalar_lea.vmem %s1, 16
  %274 = vst.msk [vmem:[%s273] sm:$0x3f] %vm272, %v271
  %s275 = scalar_lea.vmem %s0, 4
  %s276 = smov 3
  %v277 = vld [vmem:[%s275] ss:$16 sm:%s276]
  %s278 = scalar_lea.vmem %s0, 4
  %s279 = smov 12
  %v280 = vld [vmem:[%s278] ss:$16 sm:%s279]
  %vm281 = vcmask 1043458
  %v282 = vsel %vm281, %v280, %v277
  %s283 = scalar_lea.vmem %s0, 4
  %s284 = smov 48
  %v285 = vld [vmem:[%s283] ss:$16 sm:%s284]
  %vm286 = vcmask 1045508
  %v287 = vsel %vm286, %v285, %v282
  %s288 = scalar_lea.vmem %s0, 4
  %s289 = smov 192
  %v290 = vld [vmem:[%s288] ss:$16 sm:%s289]
  %vm291 = vcmask 1047558
  %v292 = vsel %vm291, %v290, %v287
  %293 = vrot.lane.b32.xlu0 %v292, 56
  %v294 = vpop.permute.xlu0 %293
  %vm295 = vcmask 572864
  %296 = vst.msk [vmem:[%s1] sm:$0xff] %vm295, %v294
  %s297 = scalar_lea.vmem %s0, 132
  %s298 = smov 3
  %v299 = vld [vmem:[%s297] ss:$16 sm:%s298]
  %s300 = scalar_lea.vmem %s0, 132
  %s301 = smov 12
  %v302 = vld [vmem:[%s300] ss:$16 sm:%s301]
  %vm303 = vcmask 1043458
  %v304 = vsel %vm303, %v302, %v299
  %s305 = scalar_lea.vmem %s0, 132
  %s306 = smov 48
  %v307 = vld [vmem:[%s305] ss:$16 sm:%s306]
  %vm308 = vcmask 1045508
  %v309 = vsel %vm308, %v307, %v304
  %310 = vrot.lane.b32.xlu0 %v309, 56
  %v311 = vpop.permute.xlu0 %310
  %vm312 = vcmask 572864
  %s313 = scalar_lea.vmem %s1, 16
  %314 = vst.msk [vmem:[%s313] sm:$0x3f] %vm312, %v311
  %s315 = scalar_lea.vmem %s0, 13
  %s316 = smov 3
  %v317 = vld [vmem:[%s315] ss:$16 sm:%s316]
  %s318 = scalar_lea.vmem %s0, 13
  %s319 = smov 12
  %v320 = vld [vmem:[%s318] ss:$16 sm:%s319]
  %vm321 = vcmask 1043458
  %v322 = vsel %vm321, %v320, %v317
  %s323 = scalar_lea.vmem %s0, 13
  %s324 = smov 48
  %v325 = vld [vmem:[%s323] ss:$16 sm:%s324]
  %vm326 = vcmask 1045508
  %v327 = vsel %vm326, %v325, %v322
  %s328 = scalar_lea.vmem %s0, 13
  %s329 = smov 192
  %v330 = vld [vmem:[%s328] ss:$16 sm:%s329]
  %vm331 = vcmask 1047558
  %v332 = vsel %vm331, %v330, %v327
  %333 = vrot.lane.b32.xlu0 %v332, 54
  %v334 = vpop.permute.xlu0 %333
  %vm335 = vcmask 556464
  %s336 = scalar_lea.vmem %s1, 8
  %337 = vst.msk [vmem:[%s336] sm:$0xff] %vm335, %v334
  %s338 = scalar_lea.vmem %s0, 141
  %s339 = smov 3
  %v340 = vld [vmem:[%s338] ss:$16 sm:%s339]
  %s341 = scalar_lea.vmem %s0, 141
  %s342 = smov 12
  %v343 = vld [vmem:[%s341] ss:$16 sm:%s342]
  %vm344 = vcmask 1043458
  %v345 = vsel %vm344, %v343, %v340
  %s346 = scalar_lea.vmem %s0, 141
  %s347 = smov 48
  %v348 = vld [vmem:[%s346] ss:$16 sm:%s347]
  %vm349 = vcmask 1045508
  %v350 = vsel %vm349, %v348, %v345
  %351 = vrot.lane.b32.xlu0 %v350, 54
  %v352 = vpop.permute.xlu0 %351
  %vm353 = vcmask 556464
  %s354 = scalar_lea.vmem %s1, 24
  %355 = vst.msk [vmem:[%s354] sm:$0x3f] %vm353, %v352
  %s356 = scalar_lea.vmem %s0, 3
  %s357 = smov 3
  %v358 = vld [vmem:[%s356] ss:$16 sm:%s357]
  %s359 = scalar_lea.vmem %s0, 3
  %s360 = smov 12
  %v361 = vld [vmem:[%s359] ss:$16 sm:%s360]
  %vm362 = vcmask 1043458
  %v363 = vsel %vm362, %v361, %v358
  %s364 = scalar_lea.vmem %s0, 3
  %s365 = smov 48
  %v366 = vld [vmem:[%s364] ss:$16 sm:%s365]
  %vm367 = vcmask 1045508
  %v368 = vsel %vm367, %v366, %v363
  %s369 = scalar_lea.vmem %s0, 3
  %s370 = smov 192
  %v371 = vld [vmem:[%s369] ss:$16 sm:%s370]
  %vm372 = vcmask 1047558
  %v373 = vsel %vm372, %v371, %v368
  %374 = vrot.lane.b32.xlu0 %v373, 42
  %v375 = vpop.permute.xlu0 %374
  %vm376 = vcmask 458064
  %377 = vst.msk [vmem:[%s1] sm:$0xff] %vm376, %v375
  %s378 = scalar_lea.vmem %s0, 131
  %s379 = smov 3
  %v380 = vld [vmem:[%s378] ss:$16 sm:%s379]
  %s381 = scalar_lea.vmem %s0, 131
  %s382 = smov 12
  %v383 = vld [vmem:[%s381] ss:$16 sm:%s382]
  %vm384 = vcmask 1043458
  %v385 = vsel %vm384, %v383, %v380
  %s386 = scalar_lea.vmem %s0, 131
  %s387 = smov 48
  %v388 = vld [vmem:[%s386] ss:$16 sm:%s387]
  %vm389 = vcmask 1045508
  %v390 = vsel %vm389, %v388, %v385
  %391 = vrot.lane.b32.xlu0 %v390, 42
  %v392 = vpop.permute.xlu0 %391
  %vm393 = vcmask 458064
  %s394 = scalar_lea.vmem %s1, 16
  %395 = vst.msk [vmem:[%s394] sm:$0x3f] %vm393, %v392
  %s396 = scalar_lea.vmem %s0, 12
  %s397 = smov 3
  %v398 = vld [vmem:[%s396] ss:$16 sm:%s397]
  %s399 = scalar_lea.vmem %s0, 12
  %s400 = smov 12
  %v401 = vld [vmem:[%s399] ss:$16 sm:%s400]
  %vm402 = vcmask 1043458
  %v403 = vsel %vm402, %v401, %v398
  %s404 = scalar_lea.vmem %s0, 12
  %s405 = smov 48
  %v406 = vld [vmem:[%s404] ss:$16 sm:%s405]
  %vm407 = vcmask 1045508
  %v408 = vsel %vm407, %v406, %v403
  %s409 = scalar_lea.vmem %s0, 12
  %s410 = smov 192
  %v411 = vld [vmem:[%s409] ss:$16 sm:%s410]
  %vm412 = vcmask 1047558
  %v413 = vsel %vm412, %v411, %v408
  %414 = vrot.lane.b32.xlu0 %v413, 40
  %v415 = vpop.permute.xlu0 %414
  %vm416 = vcmask 441664
  %s417 = scalar_lea.vmem %s1, 8
  %418 = vst.msk [vmem:[%s417] sm:$0xff] %vm416, %v415
  %s419 = scalar_lea.vmem %s0, 140
  %s420 = smov 3
  %v421 = vld [vmem:[%s419] ss:$16 sm:%s420]
  %s422 = scalar_lea.vmem %s0, 140
  %s423 = smov 12
  %v424 = vld [vmem:[%s422] ss:$16 sm:%s423]
  %vm425 = vcmask 1043458
  %v426 = vsel %vm425, %v424, %v421
  %s427 = scalar_lea.vmem %s0, 140
  %s428 = smov 48
  %v429 = vld [vmem:[%s427] ss:$16 sm:%s428]
  %vm430 = vcmask 1045508
  %v431 = vsel %vm430, %v429, %v426
  %432 = vrot.lane.b32.xlu0 %v431, 40
  %v433 = vpop.permute.xlu0 %432
  %vm434 = vcmask 441664
  %s435 = scalar_lea.vmem %s1, 24
  %436 = vst.msk [vmem:[%s435] sm:$0x3f] %vm434, %v433
  %s437 = scalar_lea.vmem %s0, 2
  %s438 = smov 3
  %v439 = vld [vmem:[%s437] ss:$16 sm:%s438]
  %s440 = scalar_lea.vmem %s0, 2
  %s441 = smov 12
  %v442 = vld [vmem:[%s440] ss:$16 sm:%s441]
  %vm443 = vcmask 1043458
  %v444 = vsel %vm443, %v442, %v439
  %s445 = scalar_lea.vmem %s0, 2
  %s446 = smov 48
  %v447 = vld [vmem:[%s445] ss:$16 sm:%s446]
  %vm448 = vcmask 1045508
  %v449 = vsel %vm448, %v447, %v444
  %s450 = scalar_lea.vmem %s0, 2
  %s451 = smov 192
  %v452 = vld [vmem:[%s450] ss:$16 sm:%s451]
  %vm453 = vcmask 1047558
  %v454 = vsel %vm453, %v452, %v449
  %455 = vrot.lane.b32.xlu0 %v454, 28
  %v456 = vpop.permute.xlu0 %455
  %vm457 = vcmask 343264
  %458 = vst.msk [vmem:[%s1] sm:$0xff] %vm457, %v456
  %s459 = scalar_lea.vmem %s0, 130
  %s460 = smov 3
  %v461 = vld [vmem:[%s459] ss:$16 sm:%s460]
  %s462 = scalar_lea.vmem %s0, 130
  %s463 = smov 12
  %v464 = vld [vmem:[%s462] ss:$16 sm:%s463]
  %vm465 = vcmask 1043458
  %v466 = vsel %vm465, %v464, %v461
  %s467 = scalar_lea.vmem %s0, 130
  %s468 = smov 48
  %v469 = vld [vmem:[%s467] ss:$16 sm:%s468]
  %vm470 = vcmask 1045508
  %v471 = vsel %vm470, %v469, %v466
  %472 = vrot.lane.b32.xlu0 %v471, 28
  %v473 = vpop.permute.xlu0 %472
  %vm474 = vcmask 343264
  %s475 = scalar_lea.vmem %s1, 16
  %476 = vst.msk [vmem:[%s475] sm:$0x3f] %vm474, %v473
  %s477 = scalar_lea.vmem %s0, 11
  %s478 = smov 3
  %v479 = vld [vmem:[%s477] ss:$16 sm:%s478]
  %s480 = scalar_lea.vmem %s0, 11
  %s481 = smov 12
  %v482 = vld [vmem:[%s480] ss:$16 sm:%s481]
  %vm483 = vcmask 1043458
  %v484 = vsel %vm483, %v482, %v479
  %s485 = scalar_lea.vmem %s0, 11
  %s486 = smov 48
  %v487 = vld [vmem:[%s485] ss:$16 sm:%s486]
  %vm488 = vcmask 1045508
  %v489 = vsel %vm488, %v487, %v484
  %s490 = scalar_lea.vmem %s0, 11
  %s491 = smov 192
  %v492 = vld [vmem:[%s490] ss:$16 sm:%s491]
  %vm493 = vcmask 1047558
  %v494 = vsel %vm493, %v492, %v489
  %495 = vrot.lane.b32.xlu0 %v494, 26
  %v496 = vpop.permute.xlu0 %495
  %vm497 = vcmask 326864
  %s498 = scalar_lea.vmem %s1, 8
  %499 = vst.msk [vmem:[%s498] sm:$0xff] %vm497, %v496
  %s500 = scalar_lea.vmem %s0, 139
  %s501 = smov 3
  %v502 = vld [vmem:[%s500] ss:$16 sm:%s501]
  %s503 = scalar_lea.vmem %s0, 139
  %s504 = smov 12
  %v505 = vld [vmem:[%s503] ss:$16 sm:%s504]
  %vm506 = vcmask 1043458
  %v507 = vsel %vm506, %v505, %v502
  %s508 = scalar_lea.vmem %s0, 139
  %s509 = smov 48
  %v510 = vld [vmem:[%s508] ss:$16 sm:%s509]
  %vm511 = vcmask 1045508
  %v512 = vsel %vm511, %v510, %v507
  %513 = vrot.lane.b32.xlu0 %v512, 26
  %v514 = vpop.permute.xlu0 %513
  %vm515 = vcmask 326864
  %s516 = scalar_lea.vmem %s1, 24
  %517 = vst.msk [vmem:[%s516] sm:$0x3f] %vm515, %v514
  %s518 = scalar_lea.vmem %s0, 1
  %s519 = smov 3
  %v520 = vld [vmem:[%s518] ss:$16 sm:%s519]
  %s521 = scalar_lea.vmem %s0, 1
  %s522 = smov 12
  %v523 = vld [vmem:[%s521] ss:$16 sm:%s522]
  %vm524 = vcmask 1043458
  %v525 = vsel %vm524, %v523, %v520
  %s526 = scalar_lea.vmem %s0, 1
  %s527 = smov 48
  %v528 = vld [vmem:[%s526] ss:$16 sm:%s527]
  %vm529 = vcmask 1045508
  %v530 = vsel %vm529, %v528, %v525
  %s531 = scalar_lea.vmem %s0, 1
  %s532 = smov 192
  %v533 = vld [vmem:[%s531] ss:$16 sm:%s532]
  %vm534 = vcmask 1047558
  %v535 = vsel %vm534, %v533, %v530
  %536 = vrot.lane.b32.xlu0 %v535, 14
  %v537 = vpop.permute.xlu0 %536
  %vm538 = vcmask 228464
  %539 = vst.msk [vmem:[%s1] sm:$0xff] %vm538, %v537
  %s540 = scalar_lea.vmem %s0, 129
  %s541 = smov 3
  %v542 = vld [vmem:[%s540] ss:$16 sm:%s541]
  %s543 = scalar_lea.vmem %s0, 129
  %s544 = smov 12
  %v545 = vld [vmem:[%s543] ss:$16 sm:%s544]
  %vm546 = vcmask 1043458
  %v547 = vsel %vm546, %v545, %v542
  %s548 = scalar_lea.vmem %s0, 129
  %s549 = smov 48
  %v550 = vld [vmem:[%s548] ss:$16 sm:%s549]
  %vm551 = vcmask 1045508
  %v552 = vsel %vm551, %v550, %v547
  %553 = vrot.lane.b32.xlu0 %v552, 14
  %v554 = vpop.permute.xlu0 %553
  %vm555 = vcmask 228464
  %s556 = scalar_lea.vmem %s1, 16
  %557 = vst.msk [vmem:[%s556] sm:$0x3f] %vm555, %v554
  %s558 = scalar_lea.vmem %s0, 10
  %s559 = smov 3
  %v560 = vld [vmem:[%s558] ss:$16 sm:%s559]
  %s561 = scalar_lea.vmem %s0, 10
  %s562 = smov 12
  %v563 = vld [vmem:[%s561] ss:$16 sm:%s562]
  %vm564 = vcmask 1043458
  %v565 = vsel %vm564, %v563, %v560
  %s566 = scalar_lea.vmem %s0, 10
  %s567 = smov 48
  %v568 = vld [vmem:[%s566] ss:$16 sm:%s567]
  %vm569 = vcmask 1045508
  %v570 = vsel %vm569, %v568, %v565
  %s571 = scalar_lea.vmem %s0, 10
  %s572 = smov 192
  %v573 = vld [vmem:[%s571] ss:$16 sm:%s572]
  %vm574 = vcmask 1047558
  %v575 = vsel %vm574, %v573, %v570
  %576 = vrot.lane.b32.xlu0 %v575, 12
  %v577 = vpop.permute.xlu0 %576
  %vm578 = vcmask 212064
  %s579 = scalar_lea.vmem %s1, 8
  %580 = vst.msk [vmem:[%s579] sm:$0xff] %vm578, %v577
  %s581 = scalar_lea.vmem %s0, 138
  %s582 = smov 3
  %v583 = vld [vmem:[%s581] ss:$16 sm:%s582]
  %s584 = scalar_lea.vmem %s0, 138
  %s585 = smov 12
  %v586 = vld [vmem:[%s584] ss:$16 sm:%s585]
  %vm587 = vcmask 1043458
  %v588 = vsel %vm587, %v586, %v583
  %s589 = scalar_lea.vmem %s0, 138
  %s590 = smov 48
  %v591 = vld [vmem:[%s589] ss:$16 sm:%s590]
  %vm592 = vcmask 1045508
  %v593 = vsel %vm592, %v591, %v588
  %594 = vrot.lane.b32.xlu0 %v593, 12
  %v595 = vpop.permute.xlu0 %594
  %vm596 = vcmask 212064
  %s597 = scalar_lea.vmem %s1, 24
  %598 = vst.msk [vmem:[%s597] sm:$0x3f] %vm596, %v595

// kernel: roller_pooling.1
$region0: #{roller_pooling.1}
  #allocation0 [shape = 'u32[]', space=smem, size = 0x4, offset = 0x4, fixed_abs, tag = 'smem constant byte address 0x4 - core index']
  #allocation1 [shape = 'u32[144,128]{1,0:T(1,128)}', space=vmem, size = 0x12000, scoped, tag = 'internal scratch']
  %s0 = inlined_call_operand.vmem [shape: s32[1,128], index: 0, kind: input, shape index: {}]
  %s1 = inlined_call_operand.vmem [shape: f32[14,128], index: 1, kind: input, shape index: {}]
  %s2 = inlined_call_operand.vmem [shape: f32[196,14], index: 2, kind: input, shape index: {}]
  %s3 = inlined_call_operand.vmem [shape: f32[14,196], index: 3, kind: input, shape index: {}]
  %s4 = inlined_call_operand.vmem [shape: f32[14,128], index: 4, kind: output, shape index: {}]
  %s5 = sld [smem:[#allocation0]]
  $region26: #{roller_pooling.1} parent=0
    _
  %s7 = ssub.s32 1, %s5
  %s8 = scalar_select 0, %s7, %s5
  // Predicated region
  $region2: #{roller_pooling.1} parent=0 // pred_check
    _
  $region3: #{roller_pooling.1} parent=0 // pred_check_branch
    %10 = sbr.rel (0) target = $region5
  $region4: #{roller_pooling.1} parent=0 // pred_region
    _
  $region5: #{roller_pooling.1} parent=0 // pred_fallthru
    _
  // Predicated region
  $region6: #{roller_pooling.1} parent=0 // pred_check
    _
  $region7: #{roller_pooling.1} parent=0 // pred_check_branch
    %12 = sbr.rel (0) target = $region9
  $region8: #{roller_pooling.1} parent=0 // pred_region
    _
  $region9: #{roller_pooling.1} parent=0 // pred_fallthru
    _
  // Predicated region
  $region10: #{roller_pooling.1} parent=0 // pred_check
    _
  $region11: #{roller_pooling.1} parent=0 // pred_check_branch
    %14 = sbr.rel (0) target = $region13
  $region12: #{roller_pooling.1} parent=0 // pred_region
    _
  $region13: #{roller_pooling.1} parent=0 // pred_fallthru
    _
  // Predicated region
  $region14: #{roller_pooling.1} parent=0 // pred_check
    _
  $region15: #{roller_pooling.1} parent=0 // pred_check_branch
    %16 = sbr.rel (0) target = $region17
  $region16: #{roller_pooling.1} parent=0 // pred_region
    _
  $region17: #{roller_pooling.1} parent=0 // pred_fallthru
    _
  %v17 = vld [vmem:[%s1] sm:$0xff]
  %v18 = vld [vmem:[%s1 + $0x8] sm:$0x3f]
  %v19 = vld [vmem:[%s0] sm:$0x1]
  %v20 = vsub.s32 %v19, 1
  %vm21 = vcmp.lt.s32.totalorder %v20, 0
  %v22 = vadd.s32 %v20, 14
  %v23 = vsel %vm21, %v22, %v20
  %v24 = vld [vmem:[%s2] sm:$0xff]
  %v25 = vld [vmem:[%s2 + $0x8] sm:$0xff]
  %v26 = vld [vmem:[%s2 + $0x10] sm:$0xff]
  %v27 = vld [vmem:[%s2 + $0x18] sm:$0xff]
  %v28 = vld [vmem:[%s2 + $0x20] sm:$0xff]
  %v29 = vld [vmem:[%s2 + $0x28] sm:$0xff]
  %v30 = vld [vmem:[%s2 + $0x30] sm:$0xff]
  %v31 = vld [vmem:[%s2 + $0x38] sm:$0xff]
  %v32 = vld [vmem:[%s2 + $0x40] sm:$0xff]
  %v33 = vld [vmem:[%s2 + $0x48] sm:$0xff]
  %v34 = vld [vmem:[%s2 + $0x50] sm:$0xff]
  %v35 = vld [vmem:[%s2 + $0x58] sm:$0xff]
  %v36 = vld [vmem:[%s2 + $0x60] sm:$0xff]
  %v37 = vld [vmem:[%s2 + $0x68] sm:$0xff]
  %v38 = vld [vmem:[%s2 + $0x70] sm:$0xff]
  %v39 = vld [vmem:[%s2 + $0x78] sm:$0xff]
  %v40 = vld [vmem:[%s2 + $0x80] sm:$0xff]
  %v41 = vld [vmem:[%s2 + $0x88] sm:$0xff]
  %v42 = vld [vmem:[%s2 + $0x90] sm:$0xff]
  %v43 = vld [vmem:[%s2 + $0x98] sm:$0xff]
  %v44 = vld [vmem:[%s2 + $0xa0] sm:$0xff]
  %v45 = vld [vmem:[%s2 + $0xa8] sm:$0xff]
  %v46 = vld [vmem:[%s2 + $0xb0] sm:$0xff]
  %v47 = vld [vmem:[%s2 + $0xb8] sm:$0xff]
  %v48 = vld [vmem:[%s2 + $0xc0] sm:$0xf]
  %vm49 = vcmask 113664
  %v51 = vsel %vm49, %v24, 0
  %v54 = vsel %vm49, %v25, 0
  %v57 = vsel %vm49, %v26, 0
  %v60 = vsel %vm49, %v27, 0
  %v63 = vsel %vm49, %v28, 0
  %v66 = vsel %vm49, %v29, 0
  %v69 = vsel %vm49, %v30, 0
  %v72 = vsel %vm49, %v31, 0
  %v75 = vsel %vm49, %v32, 0
  %v78 = vsel %vm49, %v33, 0
  %v81 = vsel %vm49, %v34, 0
  %v84 = vsel %vm49, %v35, 0
  %v87 = vsel %vm49, %v36, 0
  %v90 = vsel %vm49, %v37, 0
  %v93 = vsel %vm49, %v38, 0
  %v96 = vsel %vm49, %v39, 0
  %v99 = vsel %vm49, %v40, 0
  %v102 = vsel %vm49, %v41, 0
  %v105 = vsel %vm49, %v42, 0
  %v108 = vsel %vm49, %v43, 0
  %v111 = vsel %vm49, %v44, 0
  %v114 = vsel %vm49, %v45, 0
  %v117 = vsel %vm49, %v46, 0
  %v120 = vsel %vm49, %v47, 0
  %v123 = vsel %vm49, %v48, 0
  %vm125 = vcmask 1045504
  %v127 = vsel %vm125, %v18, 0
  %129 = vmatprep.subr.mxu0 0.0
  %130 = vmatpush1.msra.mxu0 %v17
  %131 = vmatprep.subr.mxu0 0.0
  %132 = vmatpush1.msra.mxu0 %v127
  %133 = vmatprep.subr.mxu0 0.0
  %134 = vmatpush1.msra.mxu0 0.0
  %135 = vmatprep.subr.mxu0 0.0
  %136 = vmatpush1.msra.mxu0 0.0
  %137 = vmatprep.subr.mxu0 0.0
  %138 = vmatpush1.msra.mxu0 0.0
  %139 = vmatprep.subr.mxu0 0.0
  %140 = vmatpush1.msra.mxu0 0.0
  %141 = vmatprep.subr.mxu0 0.0
  %142 = vmatpush1.msra.mxu0 0.0
  %143 = vmatprep.subr.mxu0 0.0
  %144 = vmatpush1.msra.mxu0 0.0
  %145 = vmatprep.subr.mxu0 0.0
  %146 = vmatpush1.msra.mxu0 0.0
  %147 = vmatprep.subr.mxu0 0.0
  %148 = vmatpush1.msra.mxu0 0.0
  %149 = vmatprep.subr.mxu0 0.0
  %150 = vmatpush1.msra.mxu0 0.0
  %151 = vmatprep.subr.mxu0 0.0
  %152 = vmatpush1.msra.mxu0 0.0
  %153 = vmatprep.subr.mxu0 0.0
  %154 = vmatpush1.msra.mxu0 0.0
  %155 = vmatprep.subr.mxu0 0.0
  %156 = vmatpush1.msra.mxu0 0.0
  %157 = vmatprep.subr.mxu0 0.0
  %158 = vmatpush1.msra.mxu0 0.0
  %159 = vmatprep.subr.mxu0 0.0
  %160 = vmatpush1.msra.mxu0 0.0
  %161 = vmatprep.subr.mxu0 0.0
  %162 = vmatpush1.msra.mxu0 0.0
  %163 = vmatprep.subr.mxu0 0.0
  %164 = vmatpush1.msra.mxu0 0.0
  %165 = vmatprep.subr.mxu0 0.0
  %166 = vmatpush1.msra.mxu0 0.0
  %167 = vmatprep.subr.mxu0 0.0
  %168 = vmatpush1.msra.mxu0 0.0
  %169 = vmatprep.subr.mxu0 0.0
  %170 = vmatpush1.msra.mxu0 0.0
  %171 = vmatprep.subr.mxu0 0.0
  %172 = vmatpush1.msra.mxu0 0.0
  %173 = vmatprep.subr.mxu0 0.0
  %174 = vmatpush1.msra.mxu0 0.0
  %175 = vmatprep.subr.mxu0 0.0
  %176 = vmatpush1.msra.mxu0 0.0
  %177 = vmatprep.subr.mxu0 0.0
  %178 = vmatpush1.msra.mxu0 0.0
  %179 = vmatprep.subr.mxu0 0.0
  %180 = vmatpush1.msra.mxu0 0.0
  %181 = vmatprep.subr.mxu0 0.0
  %182 = vmatpush1.msra.mxu0 0.0
  %183 = vmatprep.subr.mxu0 0.0
  %184 = vmatpush1.msra.mxu0 0.0
  %185 = vmatprep.subr.mxu0 0.0
  %186 = vmatpush1.msra.mxu0 0.0
  %187 = vmatprep.subr.mxu0 0.0
  %188 = vmatpush1.msra.mxu0 0.0
  %189 = vmatprep.subr.mxu0 0.0
  %190 = vmatpush1.msra.mxu0 0.0
  %191 = vmatprep.subr.mxu0 0.0
  %192 = vmatpush1.msra.mxu0 0.0
  %193 = vmatprep.mubr.f32.mxu0 0.0
  %194 = vmatmul.mubr.f32.gmra.mrb[0].mxu0 %v51
  %v195 = vpop.f32.mrb[0].mxu0
  %v196 = vadd.f32 0.0, %v195
  %v197 = vpop.f32.mrb[0].mxu0
  %198 = vmatprep.mubr.f32.mxu0 0.0
  %199 = vmatmul.mubr.f32.gmra.mrb[0].mxu0 %v54
  %v200 = vpop.f32.mrb[0].mxu0
  %v201 = vadd.f32 0.0, %v200
  %v202 = vpop.f32.mrb[0].mxu0
  %203 = vmatprep.mubr.f32.mxu0 0.0
  %204 = vmatmul.mubr.f32.gmra.mrb[0].mxu0 %v57
  %v205 = vpop.f32.mrb[0].mxu0
  %v206 = vadd.f32 0.0, %v205
  %v207 = vpop.f32.mrb[0].mxu0
  %208 = vmatprep.mubr.f32.mxu0 0.0
  %209 = vmatmul.mubr.f32.gmra.mrb[0].mxu0 %v60
  %v210 = vpop.f32.mrb[0].mxu0
  %v211 = vadd.f32 0.0, %v210
  %v212 = vpop.f32.mrb[0].mxu0
  %213 = vmatprep.mubr.f32.mxu0 0.0
  %214 = vmatmul.mubr.f32.gmra.mrb[0].mxu0 %v63
  %v215 = vpop.f32.mrb[0].mxu0
  %v216 = vadd.f32 0.0, %v215
  %v217 = vpop.f32.mrb[0].mxu0
  %218 = vmatprep.mubr.f32.mxu0 0.0
  %219 = vmatmul.mubr.f32.gmra.mrb[0].mxu0 %v66
  %v220 = vpop.f32.mrb[0].mxu0
  %v221 = vadd.f32 0.0, %v220
  %v222 = vpop.f32.mrb[0].mxu0
  %223 = vmatprep.mubr.f32.mxu0 0.0
  %224 = vmatmul.mubr.f32.gmra.mrb[0].mxu0 %v69
  %v225 = vpop.f32.mrb[0].mxu0
  %v226 = vadd.f32 0.0, %v225
  %v227 = vpop.f32.mrb[0].mxu0
  %228 = vmatprep.mubr.f32.mxu0 0.0
  %229 = vmatmul.mubr.f32.gmra.mrb[0].mxu0 %v72
  %v230 = vpop.f32.mrb[0].mxu0
  %v231 = vadd.f32 0.0, %v230
  %v232 = vpop.f32.mrb[0].mxu0
  %233 = vmatprep.mubr.f32.mxu0 0.0
  %234 = vmatmul.mubr.f32.gmra.mrb[0].mxu0 %v75
  %v235 = vpop.f32.mrb[0].mxu0
  %v236 = vadd.f32 0.0, %v235
  %v237 = vpop.f32.mrb[0].mxu0
  %238 = vmatprep.mubr.f32.mxu0 0.0
  %239 = vmatmul.mubr.f32.gmra.mrb[0].mxu0 %v78
  %v240 = vpop.f32.mrb[0].mxu0
  %v241 = vadd.f32 0.0, %v240
  %v242 = vpop.f32.mrb[0].mxu0
  %243 = vmatprep.mubr.f32.mxu0 0.0
  %244 = vmatmul.mubr.f32.gmra.mrb[0].mxu0 %v81
  %v245 = vpop.f32.mrb[0].mxu0
  %v246 = vadd.f32 0.0, %v245
  %v247 = vpop.f32.mrb[0].mxu0
  %248 = vmatprep.mubr.f32.mxu0 0.0
  %249 = vmatmul.mubr.f32.gmra.mrb[0].mxu0 %v84
  %v250 = vpop.f32.mrb[0].mxu0
  %v251 = vadd.f32 0.0, %v250
  %v252 = vpop.f32.mrb[0].mxu0
  %253 = vmatprep.mubr.f32.mxu0 0.0
  %254 = vmatmul.mubr.f32.gmra.mrb[0].mxu0 %v87
  %v255 = vpop.f32.mrb[0].mxu0
  %v256 = vadd.f32 0.0, %v255
  %v257 = vpop.f32.mrb[0].mxu0
  %258 = vmatprep.mubr.f32.mxu0 0.0
  %259 = vmatmul.mubr.f32.gmra.mrb[0].mxu0 %v90
  %v260 = vpop.f32.mrb[0].mxu0
  %v261 = vadd.f32 0.0, %v260
  %v262 = vpop.f32.mrb[0].mxu0
  %263 = vmatprep.mubr.f32.mxu0 0.0
  %264 = vmatmul.mubr.f32.gmra.mrb[0].mxu0 %v93
  %v265 = vpop.f32.mrb[0].mxu0
  %v266 = vadd.f32 0.0, %v265
  %v267 = vpop.f32.mrb[0].mxu0
  %268 = vmatprep.mubr.f32.mxu0 0.0
  %269 = vmatmul.mubr.f32.gmra.mrb[0].mxu0 %v96
  %v270 = vpop.f32.mrb[0].mxu0
  %v271 = vadd.f32 0.0, %v270
  %v272 = vpop.f32.mrb[0].mxu0
  %273 = vmatprep.mubr.f32.mxu0 0.0
  %274 = vmatmul.mubr.f32.gmra.mrb[0].mxu0 %v99
  %v275 = vpop.f32.mrb[0].mxu0
  %v276 = vadd.f32 0.0, %v275
  %v277 = vpop.f32.mrb[0].mxu0
  %278 = vmatprep.mubr.f32.mxu0 0.0
  %279 = vmatmul.mubr.f32.gmra.mrb[0].mxu0 %v102
  %v280 = vpop.f32.mrb[0].mxu0
  %v281 = vadd.f32 0.0, %v280
  %v282 = vpop.f32.mrb[0].mxu0
  %283 = vmatprep.mubr.f32.mxu0 0.0
  %284 = vmatmul.mubr.f32.gmra.mrb[0].mxu0 %v105
  %v285 = vpop.f32.mrb[0].mxu0
  %v286 = vadd.f32 0.0, %v285
  %v287 = vpop.f32.mrb[0].mxu0
  %288 = vmatprep.mubr.f32.mxu0 0.0
  %289 = vmatmul.mubr.f32.gmra.mrb[0].mxu0 %v108
  %v290 = vpop.f32.mrb[0].mxu0
  %v291 = vadd.f32 0.0, %v290
  %v292 = vpop.f32.mrb[0].mxu0
  %293 = vmatprep.mubr.f32.mxu0 0.0
  %294 = vmatmul.mubr.f32.gmra.mrb[0].mxu0 %v111
  %v295 = vpop.f32.mrb[0].mxu0
  %v296 = vadd.f32 0.0, %v295
  %v297 = vpop.f32.mrb[0].mxu0
  %298 = vmatprep.mubr.f32.mxu0 0.0
  %299 = vmatmul.mubr.f32.gmra.mrb[0].mxu0 %v114
  %v300 = vpop.f32.mrb[0].mxu0
  %v301 = vadd.f32 0.0, %v300
  %v302 = vpop.f32.mrb[0].mxu0
  %303 = vmatprep.mubr.f32.mxu0 0.0
  %304 = vmatmul.mubr.f32.gmra.mrb[0].mxu0 %v117
  %v305 = vpop.f32.mrb[0].mxu0
  %v306 = vadd.f32 0.0, %v305
  %v307 = vpop.f32.mrb[0].mxu0
  %308 = vmatprep.mubr.f32.mxu0 0.0
  %309 = vmatmul.mubr.f32.gmra.mrb[0].mxu0 %v120
  %v310 = vpop.f32.mrb[0].mxu0
  %v311 = vadd.f32 0.0, %v310
  %v312 = vpop.f32.mrb[0].mxu0
  %313 = vmatprep.mubr.f32.mxu0 0.0
  %314 = vmatmul.mubr.f32.gmra.mrb[0].mxu0 %v123
  %v315 = vpop.f32.mrb[0].mxu0
  %v316 = vadd.f32 0.0, %v315
  %v317 = vpop.f32.mrb[0].mxu0
  %318 = vdwg.mxu0
  %v319 = vlaneseq
  %v320 = vshrl.u32 %v319, 7
  %v321 = vadd.s32 %v320, 8
  %v322 = vadd.s32 %v320, 16
  %v323 = vadd.s32 %v320, 24
  %v324 = vadd.s32 %v320, 32
  %v325 = vadd.s32 %v320, 40
  %v326 = vadd.s32 %v320, 48
  %v327 = vadd.s32 %v320, 56
  %v328 = vadd.s32 %v320, 64
  %v329 = vadd.s32 %v320, 72
  %v330 = vadd.s32 %v320, 80
  %v331 = vadd.s32 %v320, 88
  %v332 = vadd.s32 %v320, 96
  %v333 = vadd.s32 %v320, 104
  %v334 = vadd.s32 %v320, 112
  %v335 = vadd.s32 %v320, 120
  %v336 = vadd.s32 %v320, 128
  %v337 = vadd.s32 %v320, 136
  %v338 = vadd.s32 %v320, 144
  %v339 = vadd.s32 %v320, 152
  %v340 = vadd.s32 %v320, 160
  %v341 = vadd.s32 %v320, 168
  %v342 = vadd.s32 %v320, 176
  %v343 = vadd.s32 %v320, 184
  %v344 = vadd.s32 %v320, 192
  %v345 = vmul.u32 %v23, 14
  %v346 = vlaneseq
  %v347 = vshrl.u32 %v346, 7
  %v348 = vsub.s32 0, %v347
  %v349 = vrot.slane %v345, %v348
  %vm350 = vcmp.ge.s32.totalorder %v320, %v349
  %vm351 = vcmp.ge.s32.totalorder %v321, %v349
  %vm352 = vcmp.ge.s32.totalorder %v322, %v349
  %vm353 = vcmp.ge.s32.totalorder %v323, %v349
  %vm354 = vcmp.ge.s32.totalorder %v324, %v349
  %vm355 = vcmp.ge.s32.totalorder %v325, %v349
  %vm356 = vcmp.ge.s32.totalorder %v326, %v349
  %vm357 = vcmp.ge.s32.totalorder %v327, %v349
  %vm358 = vcmp.ge.s32.totalorder %v328, %v349
  %vm359 = vcmp.ge.s32.totalorder %v329, %v349
  %vm360 = vcmp.ge.s32.totalorder %v330, %v349
  %vm361 = vcmp.ge.s32.totalorder %v331, %v349
  %vm362 = vcmp.ge.s32.totalorder %v332, %v349
  %vm363 = vcmp.ge.s32.totalorder %v333, %v349
  %vm364 = vcmp.ge.s32.totalorder %v334, %v349
  %vm365 = vcmp.ge.s32.totalorder %v335, %v349
  %vm366 = vcmp.ge.s32.totalorder %v336, %v349
  %vm367 = vcmp.ge.s32.totalorder %v337, %v349
  %vm368 = vcmp.ge.s32.totalorder %v338, %v349
  %vm369 = vcmp.ge.s32.totalorder %v339, %v349
  %vm370 = vcmp.ge.s32.totalorder %v340, %v349
  %vm371 = vcmp.ge.s32.totalorder %v341, %v349
  %vm372 = vcmp.ge.s32.totalorder %v342, %v349
  %vm373 = vcmp.ge.s32.totalorder %v343, %v349
  %vm374 = vcmp.ge.s32.totalorder %v344, %v349
  %v375 = vadd.s32 %v345, 14
  %v376 = vlaneseq
  %v377 = vshrl.u32 %v376, 7
  %v378 = vsub.s32 0, %v377
  %v379 = vrot.slane %v375, %v378
  %vm380 = vcmp.lt.s32.totalorder %v320, %v379
  %vm381 = vcmp.lt.s32.totalorder %v321, %v379
  %vm382 = vcmp.lt.s32.totalorder %v322, %v379
  %vm383 = vcmp.lt.s32.totalorder %v323, %v379
  %vm384 = vcmp.lt.s32.totalorder %v324, %v379
  %vm385 = vcmp.lt.s32.totalorder %v325, %v379
  %vm386 = vcmp.lt.s32.totalorder %v326, %v379
  %vm387 = vcmp.lt.s32.totalorder %v327, %v379
  %vm388 = vcmp.lt.s32.totalorder %v328, %v379
  %vm389 = vcmp.lt.s32.totalorder %v329, %v379
  %vm390 = vcmp.lt.s32.totalorder %v330, %v379
  %vm391 = vcmp.lt.s32.totalorder %v331, %v379
  %vm392 = vcmp.lt.s32.totalorder %v332, %v379
  %vm393 = vcmp.lt.s32.totalorder %v333, %v379
  %vm394 = vcmp.lt.s32.totalorder %v334, %v379
  %vm395 = vcmp.lt.s32.totalorder %v335, %v379
  %vm396 = vcmp.lt.s32.totalorder %v336, %v379
  %vm397 = vcmp.lt.s32.totalorder %v337, %v379
  %vm398 = vcmp.lt.s32.totalorder %v338, %v379
  %vm399 = vcmp.lt.s32.totalorder %v339, %v379
  %vm400 = vcmp.lt.s32.totalorder %v340, %v379
  %vm401 = vcmp.lt.s32.totalorder %v341, %v379
  %vm402 = vcmp.lt.s32.totalorder %v342, %v379
  %vm403 = vcmp.lt.s32.totalorder %v343, %v379
  %vm404 = vcmp.lt.s32.totalorder %v344, %v379
  %vm405 = vmand %vm350, %vm380
  %vm406 = vmand %vm351, %vm381
  %vm407 = vmand %vm352, %vm382
  %vm408 = vmand %vm353, %vm383
  %vm409 = vmand %vm354, %vm384
  %vm410 = vmand %vm355, %vm385
  %vm411 = vmand %vm356, %vm386
  %vm412 = vmand %vm357, %vm387
  %vm413 = vmand %vm358, %vm388
  %vm414 = vmand %vm359, %vm389
  %vm415 = vmand %vm360, %vm390
  %vm416 = vmand %vm361, %vm391
  %vm417 = vmand %vm362, %vm392
  %vm418 = vmand %vm363, %vm393
  %vm419 = vmand %vm364, %vm394
  %vm420 = vmand %vm365, %vm395
  %vm421 = vmand %vm366, %vm396
  %vm422 = vmand %vm367, %vm397
  %vm423 = vmand %vm368, %vm398
  %vm424 = vmand %vm369, %vm399
  %vm425 = vmand %vm370, %vm400
  %vm426 = vmand %vm371, %vm401
  %vm427 = vmand %vm372, %vm402
  %vm428 = vmand %vm373, %vm403
  %vm429 = vmand %vm374, %vm404
  %v430 = vsel %vm405, %v196, 0.0
  %v431 = vsel %vm406, %v201, 0.0
  %v432 = vsel %vm407, %v206, 0.0
  %v433 = vsel %vm408, %v211, 0.0
  %v434 = vsel %vm409, %v216, 0.0
  %v435 = vsel %vm410, %v221, 0.0
  %v436 = vsel %vm411, %v226, 0.0
  %v437 = vsel %vm412, %v231, 0.0
  %v438 = vsel %vm413, %v236, 0.0
  %v439 = vsel %vm414, %v241, 0.0
  %v440 = vsel %vm415, %v246, 0.0
  %v441 = vsel %vm416, %v251, 0.0
  %v442 = vsel %vm417, %v256, 0.0
  %v443 = vsel %vm418, %v261, 0.0
  %v444 = vsel %vm419, %v266, 0.0
  %v445 = vsel %vm420, %v271, 0.0
  %v446 = vsel %vm421, %v276, 0.0
  %v447 = vsel %vm422, %v281, 0.0
  %v448 = vsel %vm423, %v286, 0.0
  %v449 = vsel %vm424, %v291, 0.0
  %v450 = vsel %vm425, %v296, 0.0
  %v451 = vsel %vm426, %v301, 0.0
  %v452 = vsel %vm427, %v306, 0.0
  %v453 = vsel %vm428, %v311, 0.0
  %v454 = vsel %vm429, %v316, 0.0
  %v455 = vld [vmem:[%s3] sm:$0xff]
  %v456 = vld [vmem:[%s3 + $0x8] sm:$0xff]
  %v457 = vld [vmem:[%s3 + $0x10] sm:$0x3f]
  %v458 = vld [vmem:[%s3 + $0x18] sm:$0x3f]
  %vm459 = vcmask 556032
  %v461 = vsel %vm459, %v456, 0
  %v464 = vsel %vm459, %v458, 0
  %vm466 = vcmask 1043456
  %v468 = vsel %vm466, %v454, 0
  %470 = vmatprep.subr.mxu0 0.0
  %471 = vmatpush1.msra.mxu0 %v430
  %472 = vmatprep.subr.mxu0 0.0
  %473 = vmatpush1.msra.mxu0 %v431
  %474 = vmatprep.subr.mxu0 0.0
  %475 = vmatpush1.msra.mxu0 %v432
  %476 = vmatprep.subr.mxu0 0.0
  %477 = vmatpush1.msra.mxu0 %v433
  %478 = vmatprep.subr.mxu0 0.0
  %479 = vmatpush1.msra.mxu0 %v434
  %480 = vmatprep.subr.mxu0 0.0
  %481 = vmatpush1.msra.mxu0 %v435
  %482 = vmatprep.subr.mxu0 0.0
  %483 = vmatpush1.msra.mxu0 %v436
  %484 = vmatprep.subr.mxu0 0.0
  %485 = vmatpush1.msra.mxu0 %v437
  %486 = vmatprep.subr.mxu0 0.0
  %487 = vmatpush1.msra.mxu0 %v438
  %488 = vmatprep.subr.mxu0 0.0
  %489 = vmatpush1.msra.mxu0 %v439
  %490 = vmatprep.subr.mxu0 0.0
  %491 = vmatpush1.msra.mxu0 %v440
  %492 = vmatprep.subr.mxu0 0.0
  %493 = vmatpush1.msra.mxu0 %v441
  %494 = vmatprep.subr.mxu0 0.0
  %495 = vmatpush1.msra.mxu0 %v442
  %496 = vmatprep.subr.mxu0 0.0
  %497 = vmatpush1.msra.mxu0 %v443
  %498 = vmatprep.subr.mxu0 0.0
  %499 = vmatpush1.msra.mxu0 %v444
  %500 = vmatprep.subr.mxu0 0.0
  %501 = vmatpush1.msra.mxu0 %v445
  %502 = vmatprep.subr.mxu0 0.0
  %503 = vmatpush1.msra.mxu0 %v446
  %504 = vmatprep.subr.mxu0 0.0
  %505 = vmatpush1.msra.mxu0 %v447
  %506 = vmatprep.subr.mxu0 0.0
  %507 = vmatpush1.msra.mxu0 %v448
  %508 = vmatprep.subr.mxu0 0.0
  %509 = vmatpush1.msra.mxu0 %v449
  %510 = vmatprep.subr.mxu0 0.0
  %511 = vmatpush1.msra.mxu0 %v450
  %512 = vmatprep.subr.mxu0 0.0
  %513 = vmatpush1.msra.mxu0 %v451
  %514 = vmatprep.subr.mxu0 0.0
  %515 = vmatpush1.msra.mxu0 %v452
  %516 = vmatprep.subr.mxu0 0.0
  %517 = vmatpush1.msra.mxu0 %v453
  %518 = vmatprep.subr.mxu0 0.0
  %519 = vmatpush1.msra.mxu0 %v468
  %520 = vmatprep.subr.mxu0 0.0
  %521 = vmatpush1.msra.mxu0 0.0
  %522 = vmatprep.subr.mxu0 0.0
  %523 = vmatpush1.msra.mxu0 0.0
  %524 = vmatprep.subr.mxu0 0.0
  %525 = vmatpush1.msra.mxu0 0.0
  %526 = vmatprep.subr.mxu0 0.0
  %527 = vmatpush1.msra.mxu0 0.0
  %528 = vmatprep.subr.mxu0 0.0
  %529 = vmatpush1.msra.mxu0 0.0
  %530 = vmatprep.subr.mxu0 0.0
  %531 = vmatpush1.msra.mxu0 0.0
  %532 = vmatprep.subr.mxu0 0.0
  %533 = vmatpush1.msra.mxu0 0.0
  %534 = vmatprep.mubr.f32.mxu0 %v461
  %535 = vmatmul.mubr.f32.gmra.mrb[0].mxu0 %v455
  %v536 = vpop.f32.mrb[0].mxu0
  %v537 = vadd.f32 0.0, %v536
  %v538 = vpop.f32.mrb[0].mxu0
  %539 = vmatprep.mubr.f32.mxu0 %v464
  %540 = vmatmul.mubr.f32.gmra.mrb[0].mxu0 %v457
  %v541 = vpop.f32.mrb[0].mxu0
  %v542 = vadd.f32 0.0, %v541
  %v543 = vpop.f32.mrb[0].mxu0
  %544 = vdwg.mxu0
  %545 = vst [vmem:[%s4] sm:$0xff] %v537
  %546 = vst [vmem:[%s4 + $0x8] sm:$0x3f] %v542
  // Predicated region
  $region18: #{roller_pooling.1} parent=0 // pred_check
    _
  $region19: #{roller_pooling.1} parent=0 // pred_check_branch
    %548 = sbr.rel (0) target = $region21
  $region20: #{roller_pooling.1} parent=0 // pred_region
    _
  $region21: #{roller_pooling.1} parent=0 // pred_fallthru
    _
  // Predicated region
  $region22: #{roller_pooling.1} parent=0 // pred_check
    _
  $region23: #{roller_pooling.1} parent=0 // pred_check_branch
    %550 = sbr.rel (0) target = $region25
  $region24: #{roller_pooling.1} parent=0 // pred_region
    _
  $region25: #{roller_pooling.1} parent=0 // pred_fallthru
    _

</llo_original>
